<compile_context>
chip_gen: v6e
topology: v6e:2x2x1
jax: 0.10.0
libtpu: 0.0.40
codegen_flags: <defaults>
</compile_context>

<pallas_src>
import functools
import math

import numpy as np

import jax
import jax.numpy as jnp
from jax import lax
from jax.experimental import pallas as pl
from jax.experimental.pallas import tpu as pltpu

# Module hyper-parameters (s=30, m=0.3; easy_margin=True is the module default).
S = 30.0
M = 0.3
COS_M = math.cos(M)
SIN_M = math.sin(M)
TH = math.cos(math.pi - M)
MM = math.sin(math.pi - M) * M
EPS = 1e-12          # F.normalize eps
EPS2 = EPS * EPS     # x * rsqrt(max(||x||^2, eps^2)) == x / max(||x||, eps)
NEG_SENTINEL = -3.0  # below any cosine; used to mask excluded columns


def _cdiv(a, b):
    return (a + b - 1) // b


def _round_up(v, m):
    return ((v + m - 1) // m) * m


def _l2_normalize_f32(a):
    ss = jnp.sum(a * a, axis=-1, keepdims=True)
    return a * lax.rsqrt(jnp.maximum(ss, EPS2))


def _l2_normalize_bf16(a_f32):
    """F.normalize semantics in f32, cast to bf16 for the MXU."""
    return _l2_normalize_f32(a_f32).astype(jnp.bfloat16)


def _fused_kernel(x_ref, w_ref, wl_ref, lbl_ref,      # inputs
                  out_ref, maxcos_ref,                 # outputs
                  lhs_sc, phi_sc, runmax_sc,           # VMEM scratch
                  *, o_valid, w_prenorm, easy_margin):
    """Grid = (B_tiles, O_tiles); O (reduction for the running max) innermost.

    x_ref    [B_T, D]     input tile (resident per B tile)
    w_ref    [O_T, D]     weight tile (streamed over O; bf16+normalized if w_prenorm)
    wl_ref   [B_T, D]     weight[label] rows for this B tile
    lbl_ref  [B_T, 1]     int32 labels
    out_ref  [B_T, O_T]   scaled ArcFace logits tile
    maxcos_ref [B_T, 1]   max_{j != label} cos(w_n[label], w_n[j]) (written at last O)
    lhs_sc   [2*B_T, D]   bf16 stacked [x_n ; w_n[label]] (shared MXU LHS)
    phi_sc   [B_T, 1]     f32 phi at the label column
    runmax_sc[B_T, O_T]   f32 running elementwise max of masked wcos
    """
    o = pl.program_id(1)
    n_o = pl.num_programs(1)
    b_tile, o_tile = out_ref.shape

    # ---- Once per B tile: normalize x / weight[label], compute label-column phi,
    #      init the running max. phi is only ever used at one column per row, so
    #      it is a [B_T, 1] vector, not a full-tile pass.
    @pl.when(o == 0)
    def _():
        xn = _l2_normalize_bf16(x_ref[...].astype(jnp.float32))
        if w_prenorm:
            wln = wl_ref[...]                                   # already normalized bf16
        else:
            wln = _l2_normalize_bf16(wl_ref[...].astype(jnp.float32))
        lhs_sc[:b_tile, :] = xn
        lhs_sc[b_tile:, :] = wln
        cos_l = jnp.sum(xn.astype(jnp.float32) * wln.astype(jnp.float32),
                        axis=-1, keepdims=True)                 # [B_T, 1]
        sin_l = jnp.sqrt(jnp.clip(1.0 - cos_l * cos_l, 0.0, 1.0))
        phi_m = cos_l * COS_M - sin_l * SIN_M
        if easy_margin:
            phi_sc[...] = jnp.where(cos_l > 0.0, phi_m, cos_l)
        else:
            phi_sc[...] = jnp.where(cos_l > TH, phi_m, cos_l - MM)
        runmax_sc[...] = jnp.full(runmax_sc.shape, NEG_SENTINEL,
                                  dtype=runmax_sc.dtype)

    # ---- Per (B, O) tile: normalize the streamed weight tile once (skipped when the
    #      wrapper pre-normalized it); one MXU matmul over the stacked LHS yields
    #      BOTH the logits cosines and the regularization cosines.
    if w_prenorm:
        w_n = w_ref[...]                                        # [O_T, D] bf16
    else:
        w_n = _l2_normalize_bf16(w_ref[...].astype(jnp.float32))

    both = lax.dot_general(lhs_sc[...], w_n, (((1,), (1,)), ((), ())),
                           preferred_element_type=jnp.float32)  # [2*B_T, O_T]
    cos = both[:b_tile]
    wcos = both[b_tile:]

    lbl = lbl_ref[...]                                          # [B_T, 1] int32
    col = lax.broadcasted_iota(jnp.int32, (b_tile, o_tile), 1) + o * o_tile
    is_lbl = col == lbl

    # ArcFace logits: phi only at the label column, single where-select epilogue.
    out_ref[...] = (jnp.where(is_lbl, phi_sc[...], cos) * S).astype(out_ref.dtype)

    # Weight regularization: running elementwise (full-lane VPU) max of the
    # label-row-vs-all-rows cosines, label column (and ragged O tail) excluded.
    # Self-exclusion is by index (col == label), not by exact dist == 0: exact
    # duplicate weight rows would NOT be excluded here (degenerate case).
    bad = is_lbl
    if o_valid is not None:            # only emitted when O is ragged (last tile)
        bad = bad | (col >= o_valid)
    runmax_sc[...] = jnp.maximum(runmax_sc[...],
                                 jnp.where(bad, jnp.float32(NEG_SENTINEL), wcos))

    # Single cross-lane reduce + lane-sparse store, once per B tile.
    @pl.when(o == n_o - 1)
    def _():
        maxcos_ref[...] = jnp.max(runmax_sc[...], axis=1, keepdims=True)


def _detect_tpu():
    """Best-effort (VMEM capacity bytes, TensorCores per device); safe fallbacks."""
    vmem = 64 * 1024 * 1024   # conservative fallback = v7x physical VMEM per TC
    cores = 1
    try:
        info = pltpu.get_tpu_info()
        for name in ("vmem_capacity_bytes", "vmem_bytes", "vmem_size_bytes"):
            v = getattr(info, name, None)
            if v:
                vmem = int(v)
                break
        # TODO(synk): if TpuInfo exposes TensorCores-per-chip (v7x has 2), pick it up
        # here so the "parallel" B grid axis gets >= 2 tiles per chip.
        for name in ("num_tensorcores", "tensorcore_count", "num_cores", "core_count"):
            v = getattr(info, name, None)
            if v:
                cores = int(v)
                break
    except Exception:
        pass
    return vmem, cores


def _choose_tiles(B, O, D, vmem_budget, n_parts, out_itemsize):
    """Largest B tile that fits the VMEM budget (target: nb == n_parts)."""
    # O tile: full when small, else a lane-dense multiple of 128. O need not be a
    # multiple -- the ragged last tile is handled by uneven blocking + o_valid mask.
    o_tile = O if O <= 512 else 512

    def fits(bt, ot):
        f32, bf16 = 4, 2
        need = (2 * bt * D * f32              # x blocks (double-buffered)
                + 2 * bt * D * f32            # weight[label] blocks (worst case f32)
                + 2 * ot * D * f32            # weight blocks (worst case f32)
                + 2 * bt * ot * out_itemsize  # logits blocks
                + 2 * bt * 128 * f32          # label + maxcos blocks (lane-padded)
                + 2 * bt * D * bf16           # stacked [xn; wln] scratch
                + bt * ot * f32               # running-max scratch
                + bt * 128 * f32              # phi scratch (lane-padded)
                + (2 << 20))                  # compiler headroom
        return need <= vmem_budget

    b_rows = B if B % 8 == 0 else _round_up(B, 8)
    b_tile = _round_up(max(_cdiv(b_rows, n_parts), 8), 8)
    while b_tile > 8 and not fits(b_tile, o_tile):
        b_tile = max(8, _round_up(b_tile // 2, 8))
    while (not fits(b_tile, o_tile)) and o_tile > 128 and o_tile % 128 == 0:
        o_tile = max(128, (o_tile // 256) * 128)
    return b_tile, o_tile


def inter_regu_product(x, weight, label, *, out_dtype=jnp.float32):
    """Forward pass of InterReguProduct. Returns (output [B, O], weight_loss scalar)."""
    B, D = x.shape
    O = weight.shape[0]

    vmem_cap, n_cores = _detect_tpu()
    vmem_budget = (vmem_cap * 3) // 4          # ~96 MiB v5e/v6e, ~48 MiB v7x
    n_parts = n_cores if (n_cores > 1 and B >= 16 * n_cores) else 1
    b_tile, o_tile = _choose_tiles(B, O, D, vmem_budget, n_parts,
                                   jnp.dtype(out_dtype).itemsize)

    # Batch rows only padded to a sublane multiple when ragged (all B-dim arrays are
    # small next to the O*D weight, which is never padded or sliced).
    B_rows = B if B % 8 == 0 else _round_up(B, 8)
    nb = _cdiv(B_rows, b_tile)
    no = _cdiv(O, o_tile)
    prenorm = nb > 1   # weight would be re-streamed/re-normalized per B tile

    label_i32 = label.astype(jnp.int32)

    if prenorm:
        # One-time pre-normalization to bf16: halves the restreamed weight HBM bytes
        # and removes the per-(b,o) sum-of-squares/rsqrt/cast in the kernel.
        w_in = _l2_normalize_f32(weight).astype(jnp.bfloat16)
    else:
        w_in = weight
    # TODO(synk): move this B-row gather in-kernel (scalar-prefetched label + manual
    # row DMA) to drop the separate XLA gather; it is only a [B, D]-sized stream.
    wl = jnp.take(w_in, label_i32, axis=0)

    def pad_b(a):
        if a.shape[0] == B_rows:
            return a
        return jnp.pad(a, ((0, B_rows - a.shape[0]),) + ((0, 0),) * (a.ndim - 1))

    x_p = pad_b(x)
    wl_p = pad_b(wl)
    lbl_p = pad_b(label_i32.reshape(B, 1))

    o_ragged = (O % o_tile) != 0
    kernel = functools.partial(_fused_kernel,
                               o_valid=(O if o_ragged else None),
                               w_prenorm=prenorm,
                               easy_margin=True)

    out_p, maxcos = pl.pallas_call(
        kernel,
        out_shape=(jax.ShapeDtypeStruct((B_rows, O), out_dtype),
                   jax.ShapeDtypeStruct((B_rows, 1), jnp.float32)),
        grid=(nb, no),
        in_specs=[
            pl.BlockSpec((b_tile, D), lambda b, o: (b, 0)),      # x
            pl.BlockSpec((o_tile, D), lambda b, o: (o, 0)),      # weight (streamed)
            pl.BlockSpec((b_tile, D), lambda b, o: (b, 0)),      # weight[label]
            pl.BlockSpec((b_tile, 1), lambda b, o: (b, 0)),      # labels
        ],
        out_specs=(
            pl.BlockSpec((b_tile, o_tile), lambda b, o: (b, o)),  # logits
            pl.BlockSpec((b_tile, 1), lambda b, o: (b, 0)),       # max cos (resident)
        ),
        scratch_shapes=[
            pltpu.VMEM((2 * b_tile, D), jnp.bfloat16),   # stacked [x_n ; w_n[label]]
            pltpu.VMEM((b_tile, 1), jnp.float32),        # phi at the label column
            pltpu.VMEM((b_tile, o_tile), jnp.float32),   # running max cosine
        ],
        compiler_params=pltpu.CompilerParams(
            dimension_semantics=("parallel", "arbitrary"),
            vmem_limit_bytes=int(vmem_budget)),
    )(x_p, w_in, wl_p, lbl_p)

    output = out_p if B_rows == B else out_p[:B]
    # Unit-norm rows: min_{j != label} ||wl_n - w_n[j]||^2 = 2 - 2 * max cos.
    # Note: for nearly-parallel weight rows this cancellation of a bf16-MXU cosine
    # loses relative precision vs an f32 distance; acceptable for a regularizer.
    min_dist = jnp.maximum(2.0 - 2.0 * maxcos[:B, 0], 0.0)
    weight_loss = jnp.float32(B) / jnp.sum(min_dist)
    return output, weight_loss


def _reference(x, weight, label):
    """Pure-JAX reference matching the PyTorch module (generic in_features)."""
    def l2n(a):
        n = jnp.sqrt(jnp.sum(a * a, axis=-1, keepdims=True))
        return a / jnp.maximum(n, EPS)

    xn, wn = l2n(x), l2n(weight)
    cos = xn @ wn.T
    sine = jnp.sqrt(jnp.clip(1.0 - cos * cos, 0.0, 1.0))
    phi = jnp.where(cos > 0.0, cos * COS_M - sine * SIN_M, cos)
    one_hot = jax.nn.one_hot(label, weight.shape[0], dtype=cos.dtype)
    out = (one_hot * phi + (1.0 - one_hot) * cos) * S

    wl = wn[label]
    dist = jnp.sum((wl[:, None, :] - wn[None, :, :]) ** 2, axis=-1)
    values = jnp.where(dist == 0.0, 1000.0, dist)
    val = jnp.min(values, axis=1)
    wloss = label.shape[0] / jnp.sum(val)
    return out, wloss


if __name__ == "__main__":
    B = 2
    in_features = 32
    out_features = 8

    key = jax.random.PRNGKey(0)
    k_x, k_w, k_l = jax.random.split(key, 3)

    # Xavier-uniform init for weight [out_features, in_features] (deterministic).
    bound = math.sqrt(6.0 / (in_features + out_features))
    weight = jax.random.uniform(
        k_w, (out_features, in_features), jnp.float32, minval=-bound, maxval=bound)

    x = jax.random.normal(k_x, (B, in_features), jnp.float32)
    label = jax.random.randint(k_l, (B,), 0, out_features, jnp.int32)

    output, weight_loss = inter_regu_product(x, weight, label)
    jax.block_until_ready((output, weight_loss))

    assert output.shape == (B, out_features)
    assert weight_loss.shape == ()

    # Loose-tolerance sanity check vs pure-JAX reference (bf16 MXU operands).
    ref_out, ref_wloss = _reference(x, weight, label)
    np.testing.assert_allclose(np.asarray(output), np.asarray(ref_out),
                               atol=0.5, rtol=0.05)
    np.testing.assert_allclose(float(weight_loss), float(ref_wloss), rtol=0.1)

    print("KERNEL_OK")
</pallas_src>

<mosaic_0001>
module attributes {stable_mosaic.version = 11 : i64} {
  func.func @_fused_kernel(%arg0: i32, %arg1: i32, %arg2: memref<8x32xf32, #tpu.memory_space<vmem>>, %arg3: memref<8x32xf32, #tpu.memory_space<vmem>>, %arg4: memref<8x32xf32, #tpu.memory_space<vmem>>, %arg5: memref<8x1xi32, #tpu.memory_space<vmem>>, %arg6: memref<8x8xf32, #tpu.memory_space<vmem>>, %arg7: memref<8x1xf32, #tpu.memory_space<vmem>>, %arg8: memref<16x32xbf16, #tpu.memory_space<vmem>>, %arg9: memref<8x1xf32, #tpu.memory_space<vmem>>, %arg10: memref<8x8xf32, #tpu.memory_space<vmem>>) attributes {dimension_semantics = [#tpu.dimension_semantics<parallel>, #tpu.dimension_semantics<arbitrary>], iteration_bounds = array<i64: 1, 1>, scalar_prefetch = 0 : i64, scratch_operands = 3 : i64, tpu.core_type = #tpu.core_type<tc>, window_params = [{transform_indices = @transform_0, window_bounds = array<i64: 8, 32>}, {transform_indices = @transform_1, window_bounds = array<i64: 8, 32>}, {transform_indices = @transform_2, window_bounds = array<i64: 8, 32>}, {transform_indices = @transform_3, window_bounds = array<i64: 8, 1>}, {transform_indices = @transform_4, window_bounds = array<i64: 8, 8>}, {transform_indices = @transform_5, window_bounds = array<i64: 8, 1>}]} {
    %c0_i32 = arith.constant 0 : i32
    %0 = arith.cmpi eq, %arg1, %c0_i32 : i32
    %1 = arith.extui %0 : i1 to i32
    %c0_i32_0 = arith.constant 0 : i32
    %2 = arith.cmpi ne, %1, %c0_i32_0 : i32
    scf.if %2 {
      %c0_20 = arith.constant 0 : index
      %c0_21 = arith.constant 0 : index
      %39 = vector.load %arg2[%c0_20, %c0_21] : memref<8x32xf32, #tpu.memory_space<vmem>>, vector<8x32xf32>
      %40 = arith.mulf %39, %39 : vector<8x32xf32>
      %cst_22 = arith.constant dense<0.000000e+00> : vector<8xf32>
      %41 = vector.multi_reduction <add>, %40, %cst_22 [1] : vector<8x32xf32> to vector<8xf32>
      %42 = vector.shape_cast %41 : vector<8xf32> to vector<8x1xf32>
      %cst_23 = arith.constant 1.000000e-24 : f32
      %43 = vector.broadcast %cst_23 : f32 to vector<8x1xf32>
      %44 = arith.maximumf %42, %43 : vector<8x1xf32>
      %45 = math.rsqrt %44 : vector<8x1xf32>
      %46 = vector.broadcast %45 : vector<8x1xf32> to vector<8x32xf32>
      %47 = arith.mulf %39, %46 : vector<8x32xf32>
      %48 = arith.truncf %47 : vector<8x32xf32> to vector<8x32xbf16>
      %c0_24 = arith.constant 0 : index
      %c0_25 = arith.constant 0 : index
      %49 = vector.load %arg4[%c0_24, %c0_25] : memref<8x32xf32, #tpu.memory_space<vmem>>, vector<8x32xf32>
      %50 = arith.mulf %49, %49 : vector<8x32xf32>
      %cst_26 = arith.constant dense<0.000000e+00> : vector<8xf32>
      %51 = vector.multi_reduction <add>, %50, %cst_26 [1] : vector<8x32xf32> to vector<8xf32>
      %52 = vector.shape_cast %51 : vector<8xf32> to vector<8x1xf32>
      %cst_27 = arith.constant 1.000000e-24 : f32
      %53 = vector.broadcast %cst_27 : f32 to vector<8x1xf32>
      %54 = arith.maximumf %52, %53 : vector<8x1xf32>
      %55 = math.rsqrt %54 : vector<8x1xf32>
      %56 = vector.broadcast %55 : vector<8x1xf32> to vector<8x32xf32>
      %57 = arith.mulf %49, %56 : vector<8x32xf32>
      %58 = arith.truncf %57 : vector<8x32xf32> to vector<8x32xbf16>
      %c0_28 = arith.constant 0 : index
      %c0_29 = arith.constant 0 : index
      %59 = vector.load %arg8[%c0_28, %c0_29] : memref<16x32xbf16, #tpu.memory_space<vmem>>, vector<8x32xbf16>
      tpu.vector_store %arg8[%c0_28, %c0_29], %48 {strides = array<i32>} : memref<16x32xbf16, #tpu.memory_space<vmem>>, vector<8x32xbf16>,
      %c8 = arith.constant 8 : index
      %c0_30 = arith.constant 0 : index
      %60 = vector.load %arg8[%c8, %c0_30] : memref<16x32xbf16, #tpu.memory_space<vmem>>, vector<8x32xbf16>
      tpu.vector_store %arg8[%c8, %c0_30], %58 {strides = array<i32>} : memref<16x32xbf16, #tpu.memory_space<vmem>>, vector<8x32xbf16>,
      %61 = arith.extf %48 : vector<8x32xbf16> to vector<8x32xf32>
      %62 = arith.extf %58 : vector<8x32xbf16> to vector<8x32xf32>
      %63 = arith.mulf %61, %62 : vector<8x32xf32>
      %cst_31 = arith.constant dense<0.000000e+00> : vector<8xf32>
      %64 = vector.multi_reduction <add>, %63, %cst_31 [1] : vector<8x32xf32> to vector<8xf32>
      %65 = vector.shape_cast %64 : vector<8xf32> to vector<8x1xf32>
      %66 = arith.mulf %65, %65 : vector<8x1xf32>
      %cst_32 = arith.constant 1.000000e+00 : f32
      %67 = vector.broadcast %cst_32 : f32 to vector<8x1xf32>
      %68 = arith.subf %67, %66 : vector<8x1xf32>
      %cst_33 = arith.constant 0.000000e+00 : f32
      %cst_34 = arith.constant 1.000000e+00 : f32
      %69 = vector.broadcast %cst_33 : f32 to vector<8x1xf32>
      %70 = arith.maximumf %69, %68 : vector<8x1xf32>
      %71 = vector.broadcast %cst_34 : f32 to vector<8x1xf32>
      %72 = arith.minimumf %71, %70 : vector<8x1xf32>
      %73 = math.sqrt %72 : vector<8x1xf32>
      %cst_35 = arith.constant 0.955336511 : f32
      %74 = vector.broadcast %cst_35 : f32 to vector<8x1xf32>
      %75 = arith.mulf %65, %74 : vector<8x1xf32>
      %cst_36 = arith.constant 0.295520216 : f32
      %76 = vector.broadcast %cst_36 : f32 to vector<8x1xf32>
      %77 = arith.mulf %73, %76 : vector<8x1xf32>
      %78 = arith.subf %75, %77 : vector<8x1xf32>
      %cst_37 = arith.constant 0.000000e+00 : f32
      %79 = vector.broadcast %cst_37 : f32 to vector<8x1xf32>
      %80 = arith.cmpf ogt, %65, %79 : vector<8x1xf32>
      %81 = arith.select %80, %78, %65 : vector<8x1xi1>, vector<8x1xf32>
      %c0_38 = arith.constant 0 : index
      %c0_39 = arith.constant 0 : index
      %82 = vector.load %arg9[%c0_38, %c0_39] : memref<8x1xf32, #tpu.memory_space<vmem>>, vector<8x1xf32>
      tpu.vector_store %arg9[%c0_38, %c0_39], %81 {strides = array<i32>} : memref<8x1xf32, #tpu.memory_space<vmem>>, vector<8x1xf32>,
      %cst_40 = arith.constant -3.000000e+00 : f32
      %83 = vector.broadcast %cst_40 : f32 to vector<8x8xf32>
      %c0_41 = arith.constant 0 : index
      %c0_42 = arith.constant 0 : index
      %84 = vector.load %arg10[%c0_41, %c0_42] : memref<8x8xf32, #tpu.memory_space<vmem>>, vector<8x8xf32>
      tpu.vector_store %arg10[%c0_41, %c0_42], %83 {strides = array<i32>} : memref<8x8xf32, #tpu.memory_space<vmem>>, vector<8x8xf32>,
    } else {
    }
    %c0 = arith.constant 0 : index
    %c0_1 = arith.constant 0 : index
    %3 = vector.load %arg3[%c0, %c0_1] : memref<8x32xf32, #tpu.memory_space<vmem>>, vector<8x32xf32>
    %4 = arith.mulf %3, %3 : vector<8x32xf32>
    %cst = arith.constant dense<0.000000e+00> : vector<8xf32>
    %5 = vector.multi_reduction <add>, %4, %cst [1] : vector<8x32xf32> to vector<8xf32>
    %6 = vector.shape_cast %5 : vector<8xf32> to vector<8x1xf32>
    %cst_2 = arith.constant 1.000000e-24 : f32
    %7 = vector.broadcast %cst_2 : f32 to vector<8x1xf32>
    %8 = arith.maximumf %6, %7 : vector<8x1xf32>
    %9 = math.rsqrt %8 : vector<8x1xf32>
    %10 = vector.broadcast %9 : vector<8x1xf32> to vector<8x32xf32>
    %11 = arith.mulf %3, %10 : vector<8x32xf32>
    %12 = arith.truncf %11 : vector<8x32xf32> to vector<8x32xbf16>
    %c0_3 = arith.constant 0 : index
    %c0_4 = arith.constant 0 : index
    %13 = vector.load %arg8[%c0_3, %c0_4] : memref<16x32xbf16, #tpu.memory_space<vmem>>, vector<16x32xbf16>
    %cst_5 = arith.constant dense<0.000000e+00> : vector<16x8xf32>
    %14 = tpu.matmul %13, %12, %cst_5 {dimension_numbers = #tpu.dot_dimension_numbers<[1], [1], [0], [0], [0, 0, 1, 0], [], []>} : vector<16x32xbf16>, vector<8x32xbf16>, vector<16x8xf32> -> vector<16x8xf32>
    %15 = vector.extract_strided_slice %14 {offsets = [0, 0], sizes = [8, 8], strides = [1, 1]} : vector<16x8xf32> to vector<8x8xf32>
    %16 = vector.extract_strided_slice %14 {offsets = [8, 0], sizes = [8, 8], strides = [1, 1]} : vector<16x8xf32> to vector<8x8xf32>
    %c0_6 = arith.constant 0 : index
    %c0_7 = arith.constant 0 : index
    %17 = vector.load %arg5[%c0_6, %c0_7] : memref<8x1xi32, #tpu.memory_space<vmem>>, vector<8x1xi32>
    %18 = tpu.iota {dimensions = array<i32: 1>} : vector<8x8xi32>
    %c8_i32 = arith.constant 8 : i32
    %19 = arith.muli %arg1, %c8_i32 : i32
    %20 = vector.broadcast %19 : i32 to vector<8x8xi32>
    %21 = arith.addi %18, %20 : vector<8x8xi32>
    %22 = vector.broadcast %17 : vector<8x1xi32> to vector<8x8xi32>
    %23 = arith.cmpi eq, %21, %22 : vector<8x8xi32>
    %c0_8 = arith.constant 0 : index
    %c0_9 = arith.constant 0 : index
    %24 = vector.load %arg9[%c0_8, %c0_9] : memref<8x1xf32, #tpu.memory_space<vmem>>, vector<8x1xf32>
    %25 = vector.shape_cast %24 : vector<8x1xf32> to vector<8x1xf32>
    %26 = vector.broadcast %25 : vector<8x1xf32> to vector<8x8xf32>
    %27 = arith.select %23, %26, %15 : vector<8x8xi1>, vector<8x8xf32>
    %cst_10 = arith.constant 3.000000e+01 : f32
    %28 = vector.broadcast %cst_10 : f32 to vector<8x8xf32>
    %29 = arith.mulf %27, %28 : vector<8x8xf32>
    %c0_11 = arith.constant 0 : index
    %c0_12 = arith.constant 0 : index
    %30 = vector.load %arg6[%c0_11, %c0_12] : memref<8x8xf32, #tpu.memory_space<vmem>>, vector<8x8xf32>
    tpu.vector_store %arg6[%c0_11, %c0_12], %29 {strides = array<i32>} : memref<8x8xf32, #tpu.memory_space<vmem>>, vector<8x8xf32>,
    %c0_13 = arith.constant 0 : index
    %c0_14 = arith.constant 0 : index
    %31 = vector.load %arg10[%c0_13, %c0_14] : memref<8x8xf32, #tpu.memory_space<vmem>>, vector<8x8xf32>
    %cst_15 = arith.constant -3.000000e+00 : f32
    %32 = vector.broadcast %cst_15 : f32 to vector<8x8xf32>
    %33 = arith.select %23, %32, %16 : vector<8x8xi1>, vector<8x8xf32>
    %34 = arith.maximumf %31, %33 : vector<8x8xf32>
    %c0_16 = arith.constant 0 : index
    %c0_17 = arith.constant 0 : index
    %35 = vector.load %arg10[%c0_16, %c0_17] : memref<8x8xf32, #tpu.memory_space<vmem>>, vector<8x8xf32>
    tpu.vector_store %arg10[%c0_16, %c0_17], %34 {strides = array<i32>} : memref<8x8xf32, #tpu.memory_space<vmem>>, vector<8x8xf32>,
    %c0_i32_18 = arith.constant 0 : i32
    %36 = arith.cmpi eq, %arg1, %c0_i32_18 : i32
    %37 = arith.extui %36 : i1 to i32
    %c0_i32_19 = arith.constant 0 : i32
    %38 = arith.cmpi ne, %37, %c0_i32_19 : i32
    scf.if %38 {
      %c0_20 = arith.constant 0 : index
      %c0_21 = arith.constant 0 : index
      %39 = vector.load %arg10[%c0_20, %c0_21] : memref<8x8xf32, #tpu.memory_space<vmem>>, vector<8x8xf32>
      %cst_22 = arith.constant dense<0xFF800000> : vector<8xf32>
      %40 = vector.multi_reduction <maximumf>, %39, %cst_22 [1] : vector<8x8xf32> to vector<8xf32>
      %41 = vector.shape_cast %40 : vector<8xf32> to vector<8x1xf32>
      %c0_23 = arith.constant 0 : index
      %c0_24 = arith.constant 0 : index
      %42 = vector.load %arg7[%c0_23, %c0_24] : memref<8x1xf32, #tpu.memory_space<vmem>>, vector<8x1xf32>
      tpu.vector_store %arg7[%c0_23, %c0_24], %41 {strides = array<i32>} : memref<8x1xf32, #tpu.memory_space<vmem>>, vector<8x1xf32>,
    } else {
    }
    return
  }
  func.func @transform_0(%arg0: i32, %arg1: i32) -> (i32, i32) {
    %c0_i32 = arith.constant 0 : i32
    %c0_i32_0 = arith.constant 0 : i32
    return %arg0, %c0_i32 : i32, i32
  }
  func.func @transform_1(%arg0: i32, %arg1: i32) -> (i32, i32) {
    %c0_i32 = arith.constant 0 : i32
    %c0_i32_0 = arith.constant 0 : i32
    return %arg1, %c0_i32 : i32, i32
  }
  func.func @transform_2(%arg0: i32, %arg1: i32) -> (i32, i32) {
    %c0_i32 = arith.constant 0 : i32
    %c0_i32_0 = arith.constant 0 : i32
    return %arg0, %c0_i32 : i32, i32
  }
  func.func @transform_3(%arg0: i32, %arg1: i32) -> (i32, i32) {
    %c0_i32 = arith.constant 0 : i32
    %c0_i32_0 = arith.constant 0 : i32
    return %arg0, %c0_i32 : i32, i32
  }
  func.func @transform_4(%arg0: i32, %arg1: i32) -> (i32, i32) {
    %c0_i32 = arith.constant 0 : i32
    return %arg0, %arg1 : i32, i32
  }
  func.func @transform_5(%arg0: i32, %arg1: i32) -> (i32, i32) {
    %c0_i32 = arith.constant 0 : i32
    %c0_i32_0 = arith.constant 0 : i32
    return %arg0, %c0_i32 : i32, i32
  }
}

</mosaic_0001>

<llo_original>
// kernel: tpu_custom_call.1
$region0: #{tpu_custom_call.1}
  #allocation0 [shape = 'u32[]', space=smem, size = 0x4, offset = 0x4, fixed_abs, tag = 'smem constant byte address 0x4 - core index']
  #allocation1 [shape = 'u32[144,128]{1,0:T(1,128)}', space=vmem, size = 0x12000, scoped, tag = 'internal scratch']
  #allocation2 [shape = 'bf16[16,32]{1,0:T(8,128)(2,1)}', space=vmem, size = 0x1000, scoped, tag = 'scratch operand']
  #allocation3 [shape = 'f32[8,1]{1,0:T(8,128)}', space=vmem, size = 0x1000, scoped, tag = 'scratch operand']
  #allocation4 [shape = 'f32[8,8]{1,0:T(8,128)}', space=vmem, size = 0x1000, scoped, tag = 'scratch operand']
  %s0 = inlined_call_operand.vmem [shape: f32[8,32], index: 0, kind: input, shape index: {}]
  %s1 = inlined_call_operand.hbm [shape: f32[8,32], index: 1, kind: input, shape index: {}]
  %s2 = inlined_call_operand.hbm [shape: f32[8,32], index: 2, kind: input, shape index: {}]
  %s3 = inlined_call_operand.vmem [shape: s32[8,1], index: 3, kind: input, shape index: {}]
  %s4 = inlined_call_operand.hbm [shape: f32[8,8], index: 4, kind: output, shape index: {0}]
  %s5 = inlined_call_operand.vmem [shape: f32[8,1], index: 5, kind: output, shape index: {1}]
  %6 = xla_tuple %s4, %s5
  %s7 = sld [smem:[#allocation0]]
  $region50: #{tpu_custom_call.1} parent=0
    _
  %s9 = ssub.s32 1, %s7
  %s10 = scalar_select 0, %s9, %s7
  $region1: #{tpu_custom_call.1} parent=0
    #allocation5 [shape = 'u8[4096]{0}', space=vmem, size = 0x1000, scoped, tag = 'input window, operand 1, single buffered']
    #allocation6 [shape = 's32[1]{0}', space=sflag, size = 0x4, scoped, tag = 'scoped memory for tpu_custom_call.1']
    #allocation7 [shape = 's32[1]{0}', space=sflag, size = 0x4, scoped, tag = 'scoped memory for tpu_custom_call.1']
    #allocation8 [shape = 'u8[4096]{0}', space=vmem, size = 0x1000, scoped, tag = 'input window, operand 2, single buffered']
    #allocation9 [shape = 's32[1]{0}', space=sflag, size = 0x4, scoped, tag = 'scoped memory for tpu_custom_call.1']
    #allocation10 [shape = 'u8[4096]{0}', space=vmem, size = 0x1000, scoped, tag = 'output window, operand 0, single buffered']
    %11 = vsyncpa [#allocation6], 0
    %12 = vsyncpa [#allocation9], 0
    %13 = vsyncpa [#allocation7], 0
    // Predicated region
    $region2: #{tpu_custom_call.1} parent=1 // pred_check
      _
    $region3: #{tpu_custom_call.1} parent=1 // pred_check_branch
      %15 = sbr.rel (0) target = $region5
    $region4: #{tpu_custom_call.1} parent=1 // pred_region
      _
    $region5: #{tpu_custom_call.1} parent=1 // pred_fallthru
      _
    // Predicated region
    $region6: #{tpu_custom_call.1} parent=1 // pred_check
      _
    $region7: #{tpu_custom_call.1} parent=1 // pred_check_branch
      %17 = sbr.rel (0) target = $region9
    $region8: #{tpu_custom_call.1} parent=1 // pred_region
      %s19 = ssub.s32 128, 128
      %20 = vsyncadd [#allocation6], %s19
      %s22 = sshll.u32 [#allocation5], 4
      %s23 = int_to_ptr.vmem [resolvable:$true] %s22
      %25 = dma.hbm_to_vmem [thread:$0]  %s1, 128, %s23, [#allocation6]
    $region9: #{tpu_custom_call.1} parent=1 // pred_fallthru
      _
    // Predicated region
    $region10: #{tpu_custom_call.1} parent=1 // pred_check
      _
    $region11: #{tpu_custom_call.1} parent=1 // pred_check_branch
      %27 = sbr.rel (0) target = $region13
    $region12: #{tpu_custom_call.1} parent=1 // pred_region
      %s29 = ssub.s32 128, 128
      %30 = vsyncadd [#allocation9], %s29
      %s32 = sshll.u32 [#allocation8], 4
      %s33 = int_to_ptr.vmem [resolvable:$true] %s32
      %35 = dma.hbm_to_vmem [thread:$0]  %s2, 128, %s33, [#allocation9]
    $region13: #{tpu_custom_call.1} parent=1 // pred_fallthru
      _
    // Predicated region
    $region14: #{tpu_custom_call.1} parent=1 // pred_check
      _
    $region15: #{tpu_custom_call.1} parent=1 // pred_check_branch
      %37 = sbr.rel (0) target = $region17
    $region16: #{tpu_custom_call.1} parent=1 // pred_region
      _
    $region17: #{tpu_custom_call.1} parent=1 // pred_fallthru
      _
    // Predicated region
    $region18: #{tpu_custom_call.1} parent=1 // pred_check
      _
    $region19: #{tpu_custom_call.1} parent=1 // pred_check_branch
      %39 = sbr.rel (0) target = $region21
    $region20: #{tpu_custom_call.1} parent=1 // pred_region
      %40 = dma.done [#allocation6], 128
    $region21: #{tpu_custom_call.1} parent=1 // pred_fallthru
      _
    // Predicated region
    $region22: #{tpu_custom_call.1} parent=1 // pred_check
      _
    $region23: #{tpu_custom_call.1} parent=1 // pred_check_branch
      %42 = sbr.rel (0) target = $region25
    $region24: #{tpu_custom_call.1} parent=1 // pred_region
      %43 = dma.done [#allocation9], 128
    $region25: #{tpu_custom_call.1} parent=1 // pred_fallthru
      _
    %p45 = scmp.eq.s32.totalorder 0, 0
    // Predicated region
    $region26: #{tpu_custom_call.1} parent=1 // pred_check
      %p46 = pneg %p45
    $region27: #{tpu_custom_call.1} parent=1 // pred_check_branch
      %48 = sbr.rel (%p46) target = $region29
    $region28: #{tpu_custom_call.1} parent=1 // pred_region
      %v49 = vld [vmem:[%s0] sm:$0xff]
      %v50 = vmul.f32 %v49, %v49
      %vm51 = vcmask 261120
      %v52 = vsel %vm51, %v50, 0.0
      %53 = vadd.xlane.f32.xlu0 %v52
      %v54 = vpop.xlane.xlu0 %53
      %v55 = vmax.f32 %v54, 1e-24
      %v56 = vrsqrt.pop %v55
      %v57 = vmul.f32 %v49, %v56
      %v58 = vpack.c.bf16 %v57, %v57
      %v59 = vld [vmem:[#allocation8] sm:$0xff]
      %v60 = vmul.f32 %v59, %v59
      %v61 = vsel %vm51, %v60, 0.0
      %62 = vadd.xlane.f32.xlu0 %v61
      %v63 = vpop.xlane.xlu0 %62
      %v64 = vmax.f32 %v63, 1e-24
      %v65 = vrsqrt.pop %v64
      %v66 = vmul.f32 %v59, %v65
      %v67 = vpack.c.bf16 %v66, %v66
      %vm68 = vcmask 257024
      %69 = vst.msk [vmem:[#allocation2] sm:$0xf] %vm68, %v58
      %70 = vst.msk [vmem:[#allocation2 + $0x4] sm:$0xf] %vm68, %v67
      %v71 = vunpack.c.l.bf16 %v58
      %v72 = vunpack.c.l.bf16 %v67
      %v73 = vmul.f32 %v71, %v72
      %v74 = vsel %vm51, %v73, 0.0
      %75 = vadd.xlane.f32.xlu0 %v74
      %v76 = vpop.xlane.xlu0 %75
      %v77 = vmul.f32 %v76, %v76
      %v78 = vsub.f32 1.0, %v77
      %v79 = vmax.f32 %v78, 0.0
      %v80 = vmin.f32 %v79, 1.0
      %v81 = vrsqrt.pop %v80
      %v82 = vmul.f32 %v80, %v81
      %vm83 = vcmp.eq.f32.partialorder %v80, inf
      %v84 = vsel %vm83, %v80, %v82
      %vm85 = vcmp.eq.f32.partialorder %v80, 0.0
      %v86 = vand.u32 %v80, 2147483648
      %v87 = vsel %vm85, %v86, %v84
      %v88 = vmul.f32 %v76, 0.9553365
      %v89 = vmul.f32 %v87, 0.29552022
      %v90 = vsub.f32 %v88, %v89
      %vm91 = vcmp.gt.f32.partialorder %v76, 0.0
      %v92 = vsel %vm91, %v90, %v76
      %vm93 = vcmask 7168
      %94 = vst.msk [vmem:[#allocation3] sm:$0xff] %vm93, %v92
      %vm95 = vcmask 64512
      %96 = vst.msk [vmem:[#allocation4] sm:$0xff] %vm95, -3.0
    $region29: #{tpu_custom_call.1} parent=1 // pred_fallthru
      _
    %v97 = vld [vmem:[#allocation5] sm:$0xff]
    %v98 = vmul.f32 %v97, %v97
    %vm99 = vcmask 261120
    %v100 = vsel %vm99, %v98, 0.0
    %101 = vadd.xlane.f32.xlu0 %v100
    %v102 = vpop.xlane.xlu0 %101
    %v103 = vmax.f32 %v102, 1e-24
    %v104 = vrsqrt.pop %v103
    %v105 = vmul.f32 %v97, %v104
    %v106 = vpack.c.bf16 %v105, %v105
    %v107 = vld [vmem:[#allocation2] sm:$0xf]
    %v108 = vld [vmem:[#allocation2 + $0x4] sm:$0xf]
    %v111 = vunpack.c.l.b16 %v107
    %v112 = vunpack.c.l.b16 %v108
    %v113 = vpack.c.b16 %v112, %v111
    %v115 = vsel %vm99, %v113, 0
    %v118 = vsel %vm99, %v106, 0
    %120 = vmatprep.subr.bf16.mxu0 0
    %121 = vmatpush1.bf16.xpose.msra.mxu0 0
    %122 = vmatprep.subr.bf16.mxu0 0
    %123 = vmatpush1.bf16.xpose.msra.mxu0 0
    %124 = vmatprep.subr.bf16.mxu0 0
    %125 = vmatpush1.bf16.xpose.msra.mxu0 0
    %126 = vmatprep.subr.bf16.mxu0 0
    %127 = vmatpush1.bf16.xpose.msra.mxu0 0
    %128 = vmatprep.subr.bf16.mxu0 0
    %129 = vmatpush1.bf16.xpose.msra.mxu0 0
    %130 = vmatprep.subr.bf16.mxu0 0
    %131 = vmatpush1.bf16.xpose.msra.mxu0 0
    %132 = vmatprep.subr.bf16.mxu0 0
    %133 = vmatpush1.bf16.xpose.msra.mxu0 0
    %134 = vmatprep.subr.bf16.mxu0 0
    %135 = vmatpush1.bf16.xpose.msra.mxu0 %v118
    %136 = vmatprep.subr.bf16.mxu0 0
    %137 = vmatpush2.bf16.xpose.msra.mxu0 0
    %138 = vmatprep.subr.bf16.mxu0 0
    %139 = vmatpush2.bf16.xpose.msra.mxu0 0
    %140 = vmatprep.subr.bf16.mxu0 0
    %141 = vmatpush2.bf16.xpose.msra.mxu0 0
    %142 = vmatprep.subr.bf16.mxu0 0
    %143 = vmatpush2.bf16.xpose.msra.mxu0 0
    %144 = vmatprep.subr.bf16.mxu0 0
    %145 = vmatpush2.bf16.xpose.msra.mxu0 0
    %146 = vmatprep.subr.bf16.mxu0 0
    %147 = vmatpush2.bf16.xpose.msra.mxu0 0
    %148 = vmatprep.subr.bf16.mxu0 0
    %149 = vmatpush2.bf16.xpose.msra.mxu0 0
    %150 = vmatprep.subr.bf16.mxu0 0
    %151 = vmatpush2.bf16.xpose.msra.mxu0 0
    %152 = vmatprep.mubr.bf16.mxu0 0
    %153 = vmatmul.mubr.bf16.gmra.mxu0 %v115
    %v154 = vpop.f32.mrf.mxu0
    %v155 = vadd.f32 0.0, %v154
    %v156 = vpop.f32.mrf.mxu0
    %v157 = vpop.f32.mrf.mxu0
    %v158 = vadd.f32 0.0, %v157
    %v159 = vpop.f32.mrf.mxu0
    %160 = vdwg.mxu0
    %v161 = vld [vmem:[%s3] sm:$0xff]
    %v162 = vlaneseq
    %v163 = vand.u32 %v162, 127
    %s164 = smul.u32 0, 8
    %v165 = vstv %s164
    %v166 = vadd.s32 %v163, %v165
    %167 = vset.pattern.permute.xlu0 0
    %168 = vperm.xlu0 %167, %v161
    %v169 = vpop.permute.xlu0 %168
    %vm170 = vcmp.eq.s32.totalorder %v166, %v169
    %v171 = vld [vmem:[#allocation3] sm:$0xff]
    %173 = vset.pattern.permute.xlu0 0
    %174 = vperm.xlu0 %173, %v171
    %v175 = vpop.permute.xlu0 %174
    %v177 = vsel %vm170, %v175, %v155
    %v178 = vmul.f32 %v177, 30.0
    %vm179 = vcmask 64512
    %180 = vst.msk [vmem:[#allocation10] sm:$0xff] %vm179, %v178
    %v181 = vld [vmem:[#allocation4] sm:$0xff]
    %v182 = vsel %vm170, -3.0, %v158
    %v183 = vmax.f32 %v181, %v182
    %184 = vst.msk [vmem:[#allocation4] sm:$0xff] %vm179, %v183
    // Predicated region
    $region30: #{tpu_custom_call.1} parent=1 // pred_check
      %p185 = pneg %p45
    $region31: #{tpu_custom_call.1} parent=1 // pred_check_branch
      %187 = sbr.rel (%p185) target = $region33
    $region32: #{tpu_custom_call.1} parent=1 // pred_region
      %v188 = vld [vmem:[#allocation4] sm:$0xff]
      %v189 = vsel %vm179, %v188, -inf
      %190 = vmax.xlane.f32.xlu0 %v189
      %v191 = vpop.xlane.xlu0 %190
      %vm192 = vcmask 7168
      %193 = vst.msk [vmem:[%s5] sm:$0xff] %vm192, %v191
    $region33: #{tpu_custom_call.1} parent=1 // pred_fallthru
      _
    // Predicated region
    $region34: #{tpu_custom_call.1} parent=1 // pred_check
      _
    $region35: #{tpu_custom_call.1} parent=1 // pred_check_branch
      %195 = sbr.rel (0) target = $region37
    $region36: #{tpu_custom_call.1} parent=1 // pred_region
      %s197 = ssub.s32 128, 128
      %198 = vsyncadd [#allocation7], %s197
      %s200 = sshll.u32 [#allocation10], 4
      %s201 = int_to_ptr.vmem [resolvable:$true] %s200
      %203 = dma.vmem_to_hbm [thread:$0]  %s201, 128, %s4, [#allocation7]
    $region37: #{tpu_custom_call.1} parent=1 // pred_fallthru
      _
    // Predicated region
    $region38: #{tpu_custom_call.1} parent=1 // pred_check
      _
    $region39: #{tpu_custom_call.1} parent=1 // pred_check_branch
      %205 = sbr.rel (0) target = $region41
    $region40: #{tpu_custom_call.1} parent=1 // pred_region
      _
    $region41: #{tpu_custom_call.1} parent=1 // pred_fallthru
      _
    // Predicated region
    $region42: #{tpu_custom_call.1} parent=1 // pred_check
      _
    $region43: #{tpu_custom_call.1} parent=1 // pred_check_branch
      %207 = sbr.rel (0) target = $region45
    $region44: #{tpu_custom_call.1} parent=1 // pred_region
      %208 = dma.done [#allocation7], 128
    $region45: #{tpu_custom_call.1} parent=1 // pred_fallthru
      _
    // Predicated region
    $region46: #{tpu_custom_call.1} parent=1 // pred_check
      _
    $region47: #{tpu_custom_call.1} parent=1 // pred_check_branch
      %210 = sbr.rel (0) target = $region49
    $region48: #{tpu_custom_call.1} parent=1 // pred_region
      _
    $region49: #{tpu_custom_call.1} parent=1 // pred_fallthru
      _
    %211 = vsyncpa [#allocation6], 1
    %212 = vsyncpa [#allocation9], 1
    %213 = vsyncpa [#allocation7], 1

</llo_original>
